<compile_context>
chip_gen: v7x
topology: tpu7x:2x2x1
jax: 0.10.0
libtpu: 0.0.40
codegen_flags: <defaults>
</compile_context>

<pallas_src>
import jax
import jax.numpy as jnp
from jax.experimental import pallas as pl
from jax.experimental.pallas import tpu as pltpu

LANE = 128     # TPU lane width  (last dim granularity)
SUBLANE = 8    # TPU sublane width (second-to-last dim granularity, f32)


def _round_up(x, m):
    return (x + m - 1) // m * m


def emitter_kernel(z_ref, w1_ref, b1_ref, w2_ref, b2_ref, w3_ref, b3_ref, out_ref):
    # h1 = relu(z @ W1 + b1)        (MXU, f32 accumulation)
    h1 = jnp.dot(z_ref[...], w1_ref[...], preferred_element_type=jnp.float32)
    h1 = jnp.maximum(h1 + b1_ref[...], 0.0)
    # h2 = relu(h1 @ W2 + b2)
    h2 = jnp.dot(h1, w2_ref[...], preferred_element_type=jnp.float32)
    h2 = jnp.maximum(h2 + b2_ref[...], 0.0)
    # ps = sigmoid(h2 @ W3 + b3)
    logits = jnp.dot(h2, w3_ref[...], preferred_element_type=jnp.float32) + b3_ref[...]
    out_ref[...] = jax.nn.sigmoid(logits).astype(out_ref.dtype)


def init_emitter_params(key, input_dim, z_dim, emission_dim, dtype=jnp.float32):
    """Synthetic parameters matching PyTorch nn.Linear default init.
    Weights are stored (in_dim, out_dim) (transposed vs. nn.Linear) so the
    kernel computes x @ W directly; biases are (1, out_dim)."""
    ks = jax.random.split(key, 6)

    def lin(kw, kb, fan_in, fan_out):
        bound = 1.0 / jnp.sqrt(fan_in)
        w = jax.random.uniform(kw, (fan_in, fan_out), dtype, -bound, bound)
        b = jax.random.uniform(kb, (1, fan_out), dtype, -bound, bound)
        return w, b

    w1, b1 = lin(ks[0], ks[1], z_dim, emission_dim)
    w2, b2 = lin(ks[2], ks[3], emission_dim, emission_dim)
    w3, b3 = lin(ks[4], ks[5], emission_dim, input_dim)
    return {"w1": w1, "b1": b1, "w2": w2, "b2": b2, "w3": w3, "b3": b3}


def prepare_emitter_params(params):
    """One-time packing: zero-pad every feature dimension up to a multiple of
    128 lanes so the kernel works on lane-dense tiles."""
    w1, b1, w2, b2, w3, b3 = (params[k] for k in ("w1", "b1", "w2", "b2", "w3", "b3"))
    z_dim, emission_dim = w1.shape
    input_dim = w3.shape[1]
    zp = _round_up(z_dim, LANE)
    ep = _round_up(emission_dim, LANE)
    ip = _round_up(input_dim, LANE)

    def pad2(a, rows, cols):
        return jnp.pad(a, ((0, rows - a.shape[0]), (0, cols - a.shape[1])))

    return {
        "w1": pad2(w1, zp, ep), "b1": pad2(b1, 1, ep),
        "w2": pad2(w2, ep, ep), "b2": pad2(b2, 1, ep),
        "w3": pad2(w3, ep, ip), "b3": pad2(b3, 1, ip),
        "z_dim": z_dim, "input_dim": input_dim,
    }


def emitter_forward(z_t, packed, *, tile_b=128):
    """z_t: (batch, z_dim). packed: output of prepare_emitter_params."""
    batch, z_dim = z_t.shape
    input_dim = packed["input_dim"]
    w1, b1, w2, b2, w3, b3 = (packed[k] for k in ("w1", "b1", "w2", "b2", "w3", "b3"))
    zp, ep = w1.shape
    ip = w3.shape[1]

    # Batch tile: big enough to fill the MXU M dimension, never exceeding the
    # (sublane-rounded) batch itself.
    tile_b = min(tile_b, _round_up(batch, SUBLANE))
    b_pad = _round_up(batch, tile_b)

    # Zero-pad batch rows and z feature lanes (exact: sliced away at the end).
    z = jnp.pad(z_t, ((0, b_pad - batch), (0, zp - z_dim)))

    const = lambda shape: pl.BlockSpec(shape, lambda i: (0, 0))  # VMEM-resident

    out = pl.pallas_call(
        emitter_kernel,
        out_shape=jax.ShapeDtypeStruct((b_pad, ip), z_t.dtype),
        grid=(b_pad // tile_b,),
        in_specs=[
            pl.BlockSpec((tile_b, zp), lambda i: (i, 0)),   # z: streamed per tile
            const(w1.shape), const(b1.shape),               # weights/biases: fetched once
            const(w2.shape), const(b2.shape),
            const(w3.shape), const(b3.shape),
        ],
        out_specs=pl.BlockSpec((tile_b, ip), lambda i: (i, 0)),
        compiler_params=pltpu.CompilerParams(
            dimension_semantics=("parallel",)),               # 2x on v7x dual-TC
    )(z, w1, b1, w2, b2, w3, b3)

    return out[:batch, :input_dim]


def emitter_reference(z_t, p):
    h1 = jax.nn.relu(z_t @ p["w1"] + p["b1"])
    h2 = jax.nn.relu(h1 @ p["w2"] + p["b2"])
    return jax.nn.sigmoid(h2 @ p["w3"] + p["b3"])


if __name__ == "__main__":
    # Module-consistent (small) feature dims; a few hundred rows to exercise
    # the batched grid (e.g. many timesteps flattened into one call).
    input_dim, z_dim, emission_dim = 32, 8, 16
    batch = 512  # -> grid of 4 steps of 128 rows each

    key = jax.random.PRNGKey(0)
    k_params, k_z = jax.random.split(key)
    params = init_emitter_params(k_params, input_dim, z_dim, emission_dim)
    packed = prepare_emitter_params(params)
    z_t = jax.random.normal(k_z, (batch, z_dim), dtype=jnp.float32)

    ps = emitter_forward(z_t, packed)
    ps = jax.block_until_ready(ps)

    ref = emitter_reference(z_t, params)
    assert ps.shape == (batch, input_dim)
    assert jnp.allclose(ps, ref, atol=1e-5, rtol=1e-5), "mismatch vs. reference"

    # Also check a tiny, non-tile-aligned batch path (batch < tile, padding).
    z_small = jax.random.normal(jax.random.PRNGKey(1), (7, z_dim), dtype=jnp.float32)
    ps_small = jax.block_until_ready(emitter_forward(z_small, packed))
    assert jnp.allclose(ps_small, emitter_reference(z_small, params), atol=1e-5, rtol=1e-5)

    print("KERNEL_OK")
</pallas_src>

<mosaic_0001>
module attributes {stable_mosaic.version = 11 : i64} {
  func.func @emitter_kernel(%arg0: i32, %arg1: memref<128x128xf32, #tpu.memory_space<vmem>>, %arg2: memref<128x128xf32, #tpu.memory_space<vmem>>, %arg3: memref<1x128xf32, #tpu.memory_space<vmem>>, %arg4: memref<128x128xf32, #tpu.memory_space<vmem>>, %arg5: memref<1x128xf32, #tpu.memory_space<vmem>>, %arg6: memref<128x128xf32, #tpu.memory_space<vmem>>, %arg7: memref<1x128xf32, #tpu.memory_space<vmem>>, %arg8: memref<128x128xf32, #tpu.memory_space<vmem>>) attributes {dimension_semantics = [#tpu.dimension_semantics<parallel>], iteration_bounds = array<i64: 4>, scalar_prefetch = 0 : i64, scratch_operands = 0 : i64, tpu.core_type = #tpu.core_type<tc>, window_params = [{transform_indices = @transform_0, window_bounds = array<i64: 128, 128>}, {pipeline_mode = #tpu.pipeline_mode<synchronous>, transform_indices = @transform_1, window_bounds = array<i64: 128, 128>}, {pipeline_mode = #tpu.pipeline_mode<synchronous>, transform_indices = @transform_2, window_bounds = array<i64: 1, 128>}, {pipeline_mode = #tpu.pipeline_mode<synchronous>, transform_indices = @transform_3, window_bounds = array<i64: 128, 128>}, {pipeline_mode = #tpu.pipeline_mode<synchronous>, transform_indices = @transform_4, window_bounds = array<i64: 1, 128>}, {pipeline_mode = #tpu.pipeline_mode<synchronous>, transform_indices = @transform_5, window_bounds = array<i64: 128, 128>}, {pipeline_mode = #tpu.pipeline_mode<synchronous>, transform_indices = @transform_6, window_bounds = array<i64: 1, 128>}, {transform_indices = @transform_7, window_bounds = array<i64: 128, 128>}]} {
    %c0 = arith.constant 0 : index
    %c0_0 = arith.constant 0 : index
    %0 = vector.load %arg1[%c0, %c0_0] : memref<128x128xf32, #tpu.memory_space<vmem>>, vector<128x128xf32>
    %c0_1 = arith.constant 0 : index
    %c0_2 = arith.constant 0 : index
    %1 = vector.load %arg2[%c0_1, %c0_2] : memref<128x128xf32, #tpu.memory_space<vmem>>, vector<128x128xf32>
    %cst = arith.constant dense<0.000000e+00> : vector<128x128xf32>
    %2 = tpu.matmul %0, %1, %cst {dimension_numbers = #tpu.dot_dimension_numbers<[1], [0], [0], [1], [0, 0, 1, 1], [], []>} : vector<128x128xf32>, vector<128x128xf32>, vector<128x128xf32> -> vector<128x128xf32>
    %c0_3 = arith.constant 0 : index
    %c0_4 = arith.constant 0 : index
    %3 = vector.load %arg3[%c0_3, %c0_4] : memref<1x128xf32, #tpu.memory_space<vmem>>, vector<1x128xf32>
    %4 = vector.broadcast %3 : vector<1x128xf32> to vector<128x128xf32>
    %5 = arith.addf %2, %4 : vector<128x128xf32>
    %cst_5 = arith.constant 0.000000e+00 : f32
    %6 = vector.broadcast %cst_5 : f32 to vector<128x128xf32>
    %7 = arith.maximumf %5, %6 : vector<128x128xf32>
    %c0_6 = arith.constant 0 : index
    %c0_7 = arith.constant 0 : index
    %8 = vector.load %arg4[%c0_6, %c0_7] : memref<128x128xf32, #tpu.memory_space<vmem>>, vector<128x128xf32>
    %cst_8 = arith.constant dense<0.000000e+00> : vector<128x128xf32>
    %9 = tpu.matmul %7, %8, %cst_8 {dimension_numbers = #tpu.dot_dimension_numbers<[1], [0], [0], [1], [0, 0, 1, 1], [], []>} : vector<128x128xf32>, vector<128x128xf32>, vector<128x128xf32> -> vector<128x128xf32>
    %c0_9 = arith.constant 0 : index
    %c0_10 = arith.constant 0 : index
    %10 = vector.load %arg5[%c0_9, %c0_10] : memref<1x128xf32, #tpu.memory_space<vmem>>, vector<1x128xf32>
    %11 = vector.broadcast %10 : vector<1x128xf32> to vector<128x128xf32>
    %12 = arith.addf %9, %11 : vector<128x128xf32>
    %cst_11 = arith.constant 0.000000e+00 : f32
    %13 = vector.broadcast %cst_11 : f32 to vector<128x128xf32>
    %14 = arith.maximumf %12, %13 : vector<128x128xf32>
    %c0_12 = arith.constant 0 : index
    %c0_13 = arith.constant 0 : index
    %15 = vector.load %arg6[%c0_12, %c0_13] : memref<128x128xf32, #tpu.memory_space<vmem>>, vector<128x128xf32>
    %cst_14 = arith.constant dense<0.000000e+00> : vector<128x128xf32>
    %16 = tpu.matmul %14, %15, %cst_14 {dimension_numbers = #tpu.dot_dimension_numbers<[1], [0], [0], [1], [0, 0, 1, 1], [], []>} : vector<128x128xf32>, vector<128x128xf32>, vector<128x128xf32> -> vector<128x128xf32>
    %c0_15 = arith.constant 0 : index
    %c0_16 = arith.constant 0 : index
    %17 = vector.load %arg7[%c0_15, %c0_16] : memref<1x128xf32, #tpu.memory_space<vmem>>, vector<1x128xf32>
    %18 = vector.broadcast %17 : vector<1x128xf32> to vector<128x128xf32>
    %19 = arith.addf %16, %18 : vector<128x128xf32>
    %20 = arith.negf %19 : vector<128x128xf32>
    %21 = math.exp %20 : vector<128x128xf32>
    %cst_17 = arith.constant 1.000000e+00 : f32
    %22 = vector.broadcast %cst_17 : f32 to vector<128x128xf32>
    %23 = arith.addf %22, %21 : vector<128x128xf32>
    %24 = arith.divf %22, %23 : vector<128x128xf32>
    %c0_18 = arith.constant 0 : index
    %c0_19 = arith.constant 0 : index
    %25 = vector.load %arg8[%c0_18, %c0_19] : memref<128x128xf32, #tpu.memory_space<vmem>>, vector<128x128xf32>
    tpu.vector_store %arg8[%c0_18, %c0_19], %24 {strides = array<i32>} : memref<128x128xf32, #tpu.memory_space<vmem>>, vector<128x128xf32>,
    return
  }
  func.func @transform_0(%arg0: i32) -> (i32, i32) {
    %c0_i32 = arith.constant 0 : i32
    %c0_i32_0 = arith.constant 0 : i32
    return %arg0, %c0_i32 : i32, i32
  }
  func.func @transform_1(%arg0: i32) -> (i32, i32) {
    %c0_i32 = arith.constant 0 : i32
    %c0_i32_0 = arith.constant 0 : i32
    %c0_i32_1 = arith.constant 0 : i32
    return %c0_i32, %c0_i32_0 : i32, i32
  }
  func.func @transform_2(%arg0: i32) -> (i32, i32) {
    %c0_i32 = arith.constant 0 : i32
    %c0_i32_0 = arith.constant 0 : i32
    %c0_i32_1 = arith.constant 0 : i32
    return %c0_i32, %c0_i32_0 : i32, i32
  }
  func.func @transform_3(%arg0: i32) -> (i32, i32) {
    %c0_i32 = arith.constant 0 : i32
    %c0_i32_0 = arith.constant 0 : i32
    %c0_i32_1 = arith.constant 0 : i32
    return %c0_i32, %c0_i32_0 : i32, i32
  }
  func.func @transform_4(%arg0: i32) -> (i32, i32) {
    %c0_i32 = arith.constant 0 : i32
    %c0_i32_0 = arith.constant 0 : i32
    %c0_i32_1 = arith.constant 0 : i32
    return %c0_i32, %c0_i32_0 : i32, i32
  }
  func.func @transform_5(%arg0: i32) -> (i32, i32) {
    %c0_i32 = arith.constant 0 : i32
    %c0_i32_0 = arith.constant 0 : i32
    %c0_i32_1 = arith.constant 0 : i32
    return %c0_i32, %c0_i32_0 : i32, i32
  }
  func.func @transform_6(%arg0: i32) -> (i32, i32) {
    %c0_i32 = arith.constant 0 : i32
    %c0_i32_0 = arith.constant 0 : i32
    %c0_i32_1 = arith.constant 0 : i32
    return %c0_i32, %c0_i32_0 : i32, i32
  }
  func.func @transform_7(%arg0: i32) -> (i32, i32) {
    %c0_i32 = arith.constant 0 : i32
    %c0_i32_0 = arith.constant 0 : i32
    return %arg0, %c0_i32 : i32, i32
  }
}

</mosaic_0001>

<llo_original>
// kernel: tpu_custom_call.1
$region0: #{tpu_custom_call.1}
  #allocation0 [shape = 'u32[]', space=smem, size = 0x4, offset = 0x4, fixed_abs, tag = 'smem constant byte address 0x4 - core index']
  #allocation1 [shape = 'u32[144,128]{1,0:T(1,128)}', space=vmem, size = 0x12000, scoped, tag = 'internal scratch']
  %s0 = inlined_call_operand.hbm [shape: f32[512,128], index: 0, kind: input, shape index: {}]
  %s1 = inlined_call_operand.hbm [shape: f32[128,128], index: 1, kind: input, shape index: {}]
  %s2 = inlined_call_operand.vmem [shape: f32[1,128], index: 2, kind: input, shape index: {}]
  %s3 = inlined_call_operand.hbm [shape: f32[128,128], index: 3, kind: input, shape index: {}]
  %s4 = inlined_call_operand.vmem [shape: f32[1,128], index: 4, kind: input, shape index: {}]
  %s5 = inlined_call_operand.hbm [shape: f32[128,128], index: 5, kind: input, shape index: {}]
  %s6 = inlined_call_operand.vmem [shape: f32[1,128], index: 6, kind: input, shape index: {}]
  %s7 = inlined_call_operand.hbm [shape: f32[512,128], index: 7, kind: output, shape index: {}]
  %s8 = sld [smem:[#allocation0]]
  $region77: #{tpu_custom_call.1} parent=0
    _
  %s10 = ssub.s32 1, %s8
  %s11 = scalar_select 0, %s10, %s8
  $region1: #{tpu_custom_call.1} parent=0
    #allocation2 [shape = 'u8[131072]{0}', space=vmem, size = 0x20000, scoped, tag = 'input window, operand 0']
    #allocation3 [shape = 's32[2]{0}', space=sflag, size = 0x8, scoped, tag = 'scoped memory for tpu_custom_call.1']
    #allocation4 [shape = 's32[2]{0}', space=sflag, size = 0x8, scoped, tag = 'scoped memory for tpu_custom_call.1']
    #allocation5 [shape = 'u8[65536]{0}', space=vmem, size = 0x10000, scoped, tag = 'input window, operand 1, single buffered']
    #allocation6 [shape = 's32[1]{0}', space=sflag, size = 0x4, scoped, tag = 'scoped memory for tpu_custom_call.1']
    #allocation7 [shape = 'u8[65536]{0}', space=vmem, size = 0x10000, scoped, tag = 'input window, operand 3, single buffered']
    #allocation8 [shape = 'u8[65536]{0}', space=vmem, size = 0x10000, scoped, tag = 'input window, operand 5, single buffered']
    #allocation9 [shape = 's32[1]{0}', space=sflag, size = 0x4, scoped, tag = 'scoped memory for tpu_custom_call.1']
    #allocation10 [shape = 'u8[131072]{0}', space=vmem, size = 0x20000, scoped, tag = 'output window, operand 0']
    %12 = vsyncpa [#allocation3], 0
    %s13 = scalar_lea.sflag [#allocation3], 1
    %14 = vsyncpa %s13, 0
    %15 = vsyncpa [#allocation6], 0
    %16 = vsyncpa [#allocation9], 0
    %17 = vsyncpa [#allocation4], 0
    %s18 = scalar_lea.sflag [#allocation4], 1
    %19 = vsyncpa %s18, 0
    loop: start=0, step=1, limit=6
    $region2: #{tpu_custom_call.1} parent=1 // loop_pre_header
      _
    $region3: #{tpu_custom_call.1} parent=1 // loop_header
      %s21 = sphi 0, %s25
      %p22 = scmp.ge.s32.totalorder %s21, 6
      %s31 = sphi 0, %s33
      %s34 = sphi 0, %s31
      %s35 = sphi 0, %s34
      %s51 = sphi 0, %s35
      %s55 = sphi 0, %s55
      %s57 = sphi 0, %s55
      %s58 = sphi 0, %s57
      %s72 = sphi 0, %s58
      %s76 = sphi 0, %s76
      %s78 = sphi 0, %s76
      %s79 = sphi 0, %s78
      %s93 = sphi 0, %s79
      %s97 = sphi 0, %s97
      %s99 = sphi 0, %s97
      %s100 = sphi 0, %s99
      %s114 = sphi 0, %s100
      %s118 = sphi 0, %s118
      %s120 = sphi 0, %s118
      %s121 = sphi 0, %s120
      %s135 = sphi 0, %s121
      %s139 = sphi 0, %s139
      %s141 = sphi 0, %s139
      %s142 = sphi 0, %s141
      %s156 = sphi 0, %s142
      %s160 = sphi 0, %s160
      %s162 = sphi 0, %s160
      %s163 = sphi 0, %s162
      %s177 = sphi 0, %s163
      %s183 = sphi 0, %s185
      %s186 = sphi 0, %s183
      %s187 = sphi 0, %s186
      %s203 = sphi 0, %s187
    $region4: #{tpu_custom_call.1} parent=1 // loop_header_branch
      %24 = sbr.rel (%p22) target = $region8
    $region5: #{tpu_custom_call.1} parent=1 // loop_body
      %s26 = ssub.s32 %s21, 1
      %s27 = ssub.s32 %s21, 2
      %s28 = sadd.s32 %s21, 1
      %s29 = ssub.s32 %s21, %s28
      %p30 = scmp.eq.s32.totalorder %s29, 0
      %s32 = sadd.s32 %s31, 1
      %s33 = scalar_select %p30, %s31, %s32
      %p36 = pneg %p30
      %p37 = scmp.eq.s32.totalorder %s21, 3
      %p38 = por %p36, %p37
      %p39 = scmp.ne.s32.totalorder %s31, %s34
      %p40 = scmp.eq.s32.totalorder %s21, 0
      %p41 = por %p39, %p40
      %p42 = scmp.ne.s32.totalorder %s31, %s34
      %p43 = scmp.eq.s32.totalorder %s26, 3
      %p44 = por %p42, %p43
      %p45 = scmp.ne.s32.totalorder %s34, %s35
      %p46 = scmp.eq.s32.totalorder %s26, 0
      %p47 = por %p45, %p46
      %p48 = scmp.ne.s32.totalorder %s34, %s35
      %p49 = scmp.eq.s32.totalorder %s27, 3
      %p50 = por %p48, %p49
      %p52 = scmp.ne.s32.totalorder %s35, %s51
      %p53 = scmp.eq.s32.totalorder %s27, 0
      %p54 = por %p52, %p53
      %s56 = sadd.s32 %s55, 1
      %p59 = scmp.eq.s32.totalorder %s21, 3
      %p60 = scmp.ne.s32.totalorder %s55, %s57
      %p61 = scmp.eq.s32.totalorder %s21, 0
      %p62 = por %p60, %p61
      %p63 = scmp.ne.s32.totalorder %s55, %s57
      %p64 = scmp.eq.s32.totalorder %s26, 3
      %p65 = por %p63, %p64
      %p66 = scmp.ne.s32.totalorder %s57, %s58
      %p67 = scmp.eq.s32.totalorder %s26, 0
      %p68 = por %p66, %p67
      %p69 = scmp.ne.s32.totalorder %s57, %s58
      %p70 = scmp.eq.s32.totalorder %s27, 3
      %p71 = por %p69, %p70
      %p73 = scmp.ne.s32.totalorder %s58, %s72
      %p74 = scmp.eq.s32.totalorder %s27, 0
      %p75 = por %p73, %p74
      %s77 = sadd.s32 %s76, 1
      %p80 = scmp.eq.s32.totalorder %s21, 3
      %p81 = scmp.ne.s32.totalorder %s76, %s78
      %p82 = scmp.eq.s32.totalorder %s21, 0
      %p83 = por %p81, %p82
      %p84 = scmp.ne.s32.totalorder %s76, %s78
      %p85 = scmp.eq.s32.totalorder %s26, 3
      %p86 = por %p84, %p85
      %p87 = scmp.ne.s32.totalorder %s78, %s79
      %p88 = scmp.eq.s32.totalorder %s26, 0
      %p89 = por %p87, %p88
      %p90 = scmp.ne.s32.totalorder %s78, %s79
      %p91 = scmp.eq.s32.totalorder %s27, 3
      %p92 = por %p90, %p91
      %p94 = scmp.ne.s32.totalorder %s79, %s93
      %p95 = scmp.eq.s32.totalorder %s27, 0
      %p96 = por %p94, %p95
      %s98 = sadd.s32 %s97, 1
      %p101 = scmp.eq.s32.totalorder %s21, 3
      %p102 = scmp.ne.s32.totalorder %s97, %s99
      %p103 = scmp.eq.s32.totalorder %s21, 0
      %p104 = por %p102, %p103
      %p105 = scmp.ne.s32.totalorder %s97, %s99
      %p106 = scmp.eq.s32.totalorder %s26, 3
      %p107 = por %p105, %p106
      %p108 = scmp.ne.s32.totalorder %s99, %s100
      %p109 = scmp.eq.s32.totalorder %s26, 0
      %p110 = por %p108, %p109
      %p111 = scmp.ne.s32.totalorder %s99, %s100
      %p112 = scmp.eq.s32.totalorder %s27, 3
      %p113 = por %p111, %p112
      %p115 = scmp.ne.s32.totalorder %s100, %s114
      %p116 = scmp.eq.s32.totalorder %s27, 0
      %p117 = por %p115, %p116
      %s119 = sadd.s32 %s118, 1
      %p122 = scmp.eq.s32.totalorder %s21, 3
      %p123 = scmp.ne.s32.totalorder %s118, %s120
      %p124 = scmp.eq.s32.totalorder %s21, 0
      %p125 = por %p123, %p124
      %p126 = scmp.ne.s32.totalorder %s118, %s120
      %p127 = scmp.eq.s32.totalorder %s26, 3
      %p128 = por %p126, %p127
      %p129 = scmp.ne.s32.totalorder %s120, %s121
      %p130 = scmp.eq.s32.totalorder %s26, 0
      %p131 = por %p129, %p130
      %p132 = scmp.ne.s32.totalorder %s120, %s121
      %p133 = scmp.eq.s32.totalorder %s27, 3
      %p134 = por %p132, %p133
      %p136 = scmp.ne.s32.totalorder %s121, %s135
      %p137 = scmp.eq.s32.totalorder %s27, 0
      %p138 = por %p136, %p137
      %s140 = sadd.s32 %s139, 1
      %p143 = scmp.eq.s32.totalorder %s21, 3
      %p144 = scmp.ne.s32.totalorder %s139, %s141
      %p145 = scmp.eq.s32.totalorder %s21, 0
      %p146 = por %p144, %p145
      %p147 = scmp.ne.s32.totalorder %s139, %s141
      %p148 = scmp.eq.s32.totalorder %s26, 3
      %p149 = por %p147, %p148
      %p150 = scmp.ne.s32.totalorder %s141, %s142
      %p151 = scmp.eq.s32.totalorder %s26, 0
      %p152 = por %p150, %p151
      %p153 = scmp.ne.s32.totalorder %s141, %s142
      %p154 = scmp.eq.s32.totalorder %s27, 3
      %p155 = por %p153, %p154
      %p157 = scmp.ne.s32.totalorder %s142, %s156
      %p158 = scmp.eq.s32.totalorder %s27, 0
      %p159 = por %p157, %p158
      %s161 = sadd.s32 %s160, 1
      %p164 = scmp.eq.s32.totalorder %s21, 3
      %p165 = scmp.ne.s32.totalorder %s160, %s162
      %p166 = scmp.eq.s32.totalorder %s21, 0
      %p167 = por %p165, %p166
      %p168 = scmp.ne.s32.totalorder %s160, %s162
      %p169 = scmp.eq.s32.totalorder %s26, 3
      %p170 = por %p168, %p169
      %p171 = scmp.ne.s32.totalorder %s162, %s163
      %p172 = scmp.eq.s32.totalorder %s26, 0
      %p173 = por %p171, %p172
      %p174 = scmp.ne.s32.totalorder %s162, %s163
      %p175 = scmp.eq.s32.totalorder %s27, 3
      %p176 = por %p174, %p175
      %p178 = scmp.ne.s32.totalorder %s163, %s177
      %p179 = scmp.eq.s32.totalorder %s27, 0
      %p180 = por %p178, %p179
      %s181 = ssub.s32 %s21, %s28
      %p182 = scmp.eq.s32.totalorder %s181, 0
      %s184 = sadd.s32 %s183, 1
      %s185 = scalar_select %p182, %s183, %s184
      %p188 = pneg %p182
      %p189 = scmp.eq.s32.totalorder %s21, 3
      %p190 = por %p188, %p189
      %p191 = scmp.ne.s32.totalorder %s183, %s186
      %p192 = scmp.eq.s32.totalorder %s21, 0
      %p193 = por %p191, %p192
      %p194 = scmp.ne.s32.totalorder %s183, %s186
      %p195 = scmp.eq.s32.totalorder %s26, 3
      %p196 = por %p194, %p195
      %p197 = scmp.ne.s32.totalorder %s186, %s187
      %p198 = scmp.eq.s32.totalorder %s26, 0
      %p199 = por %p197, %p198
      %p200 = scmp.ne.s32.totalorder %s186, %s187
      %p201 = scmp.eq.s32.totalorder %s27, 3
      %p202 = por %p200, %p201
      %p204 = scmp.ne.s32.totalorder %s187, %s203
      %p205 = scmp.eq.s32.totalorder %s27, 0
      %p206 = por %p204, %p205
      %p207 = scmp.le.s32.totalorder 1, %s21
      %p208 = scmp.lt.s32.totalorder %s21, 5
      %p209 = pnand %p207, %p208
      %p210 = pneg %p209
      // Predicated region
      $region9: #{tpu_custom_call.1} parent=5 // pred_check
        _
      $region10: #{tpu_custom_call.1} parent=5 // pred_check_branch
        %212 = sbr.rel (%p209) target = $region12
      $region11: #{tpu_custom_call.1} parent=5 // pred_region
        %s213 = ssub.s32 %s21, 1
        // Predicated region
        $region13: #{tpu_custom_call.1} parent=11 // pred_check
          %p214 = pneg %p68
        $region14: #{tpu_custom_call.1} parent=11 // pred_check_branch
          %216 = sbr.rel (%p214) target = $region16
        $region15: #{tpu_custom_call.1} parent=11 // pred_region
          %s218 = ssub.s32 2048, 2048
          %219 = vsyncadd [#allocation6], %s218
          %s220 = sshll.u32 [#allocation5], 4
          %s221 = int_to_ptr.vmem [resolvable:$true] %s220
          %226 = dma.hbm_to_vmem [thread:$0]  %s1, 2048, %s221, [#allocation6], 128, 128, 8
        $region16: #{tpu_custom_call.1} parent=11 // pred_fallthru
          _
        // Predicated region
        $region17: #{tpu_custom_call.1} parent=11 // pred_check
          %p227 = pneg %p89
        $region18: #{tpu_custom_call.1} parent=11 // pred_check_branch
          %229 = sbr.rel (%p227) target = $region20
        $region19: #{tpu_custom_call.1} parent=11 // pred_region
          _
        $region20: #{tpu_custom_call.1} parent=11 // pred_fallthru
          _
        // Predicated region
        $region21: #{tpu_custom_call.1} parent=11 // pred_check
          %p230 = pneg %p110
        $region22: #{tpu_custom_call.1} parent=11 // pred_check_branch
          %232 = sbr.rel (%p230) target = $region24
        $region23: #{tpu_custom_call.1} parent=11 // pred_region
          %s234 = ssub.s32 2048, 2048
          %235 = vsyncadd [#allocation6], %s234
          %s236 = sshll.u32 [#allocation7], 4
          %s237 = int_to_ptr.vmem [resolvable:$true] %s236
          %242 = dma.hbm_to_vmem [thread:$0]  %s3, 2048, %s237, [#allocation6], 128, 128, 8
        $region24: #{tpu_custom_call.1} parent=11 // pred_fallthru
          _
        // Predicated region
        $region25: #{tpu_custom_call.1} parent=11 // pred_check
          %p243 = pneg %p131
        $region26: #{tpu_custom_call.1} parent=11 // pred_check_branch
          %245 = sbr.rel (%p243) target = $region28
        $region27: #{tpu_custom_call.1} parent=11 // pred_region
          _
        $region28: #{tpu_custom_call.1} parent=11 // pred_fallthru
          _
        // Predicated region
        $region29: #{tpu_custom_call.1} parent=11 // pred_check
          %p246 = pneg %p152
        $region30: #{tpu_custom_call.1} parent=11 // pred_check_branch
          %248 = sbr.rel (%p246) target = $region32
        $region31: #{tpu_custom_call.1} parent=11 // pred_region
          %s250 = ssub.s32 2048, 2048
          %251 = vsyncadd [#allocation9], %s250
          %s252 = sshll.u32 [#allocation8], 4
          %s253 = int_to_ptr.vmem [resolvable:$true] %s252
          %258 = dma.hbm_to_vmem [thread:$0]  %s5, 2048, %s253, [#allocation9], 128, 128, 8
        $region32: #{tpu_custom_call.1} parent=11 // pred_fallthru
          _
        // Predicated region
        $region33: #{tpu_custom_call.1} parent=11 // pred_check
          %p259 = pneg %p173
        $region34: #{tpu_custom_call.1} parent=11 // pred_check_branch
          %261 = sbr.rel (%p259) target = $region36
        $region35: #{tpu_custom_call.1} parent=11 // pred_region
          _
        $region36: #{tpu_custom_call.1} parent=11 // pred_fallthru
          _
      $region12: #{tpu_custom_call.1} parent=5 // pred_fallthru
        _
      %p262 = scmp.lt.s32.totalorder %s21, 4
      // Predicated region
      $region37: #{tpu_custom_call.1} parent=5 // pred_check
        %p263 = pneg %p262
      $region38: #{tpu_custom_call.1} parent=5 // pred_check_branch
        %265 = sbr.rel (%p263) target = $region40
      $region39: #{tpu_custom_call.1} parent=5 // pred_region
        // Predicated region
        $region41: #{tpu_custom_call.1} parent=39 // pred_check
          %p266 = pneg %p41
        $region42: #{tpu_custom_call.1} parent=39 // pred_check_branch
          %268 = sbr.rel (%p266) target = $region44
        $region43: #{tpu_custom_call.1} parent=39 // pred_region
          %s269 = sand.u32 %s31, 1
          %s270 = scalar_lea.sflag [#allocation3], %s269
          %s271 = sand.u32 %s31, 1
          %s272 = smul.addr %s271, 128
          %s273 = scalar_lea.vmem [#allocation2], %s272
          %s274 = smul.u32 16, %s21
          %s276 = ssub.s32 2048, 2048
          %277 = vsyncadd %s270, %s276
          %s278 = smul.addr %s274, 128
          %s279 = scalar_lea.hbm %s0, %s278
          %s280 = sshll.u32 %s273, 4
          %s281 = int_to_ptr.vmem [resolvable:$true] %s280
          %286 = dma.hbm_to_vmem [thread:$0]  %s279, 2048, %s281, %s270, 128, 128, 8
        $region44: #{tpu_custom_call.1} parent=39 // pred_fallthru
          _
      $region40: #{tpu_custom_call.1} parent=5 // pred_fallthru
        _
      %p287 = scmp.le.s32.totalorder 1, %s21
      %p288 = scmp.lt.s32.totalorder %s21, 5
      %p289 = pnand %p287, %p288
      %p290 = pneg %p289
      // Predicated region
      $region45: #{tpu_custom_call.1} parent=5 // pred_check
        _
      $region46: #{tpu_custom_call.1} parent=5 // pred_check_branch
        %292 = sbr.rel (%p289) target = $region48
      $region47: #{tpu_custom_call.1} parent=5 // pred_region
        %s293 = ssub.s32 %s21, 1
        %s294 = sand.u32 %s34, 1
        %s295 = scalar_lea.sflag [#allocation3], %s294
        %s296 = sand.u32 %s34, 1
        %s297 = smul.addr %s296, 128
        %s298 = scalar_lea.vmem [#allocation2], %s297
        // Predicated region
        $region49: #{tpu_custom_call.1} parent=47 // pred_check
          %p299 = pneg %p47
        $region50: #{tpu_custom_call.1} parent=47 // pred_check_branch
          %301 = sbr.rel (%p299) target = $region52
        $region51: #{tpu_custom_call.1} parent=47 // pred_region
          %302 = dma.done %s295, 2048
        $region52: #{tpu_custom_call.1} parent=47 // pred_fallthru
          _
        // Predicated region
        $region53: #{tpu_custom_call.1} parent=47 // pred_check
          %p303 = pneg %p68
        $region54: #{tpu_custom_call.1} parent=47 // pred_check_branch
          %305 = sbr.rel (%p303) target = $region56
        $region55: #{tpu_custom_call.1} parent=47 // pred_region
          %306 = dma.done [#allocation6], 2048
        $region56: #{tpu_custom_call.1} parent=47 // pred_fallthru
          _
        // Predicated region
        $region57: #{tpu_custom_call.1} parent=47 // pred_check
          %p307 = pneg %p110
        $region58: #{tpu_custom_call.1} parent=47 // pred_check_branch
          %309 = sbr.rel (%p307) target = $region60
        $region59: #{tpu_custom_call.1} parent=47 // pred_region
          %310 = dma.done [#allocation6], 2048
        $region60: #{tpu_custom_call.1} parent=47 // pred_fallthru
          _
        // Predicated region
        $region61: #{tpu_custom_call.1} parent=47 // pred_check
          %p311 = pneg %p152
        $region62: #{tpu_custom_call.1} parent=47 // pred_check_branch
          %313 = sbr.rel (%p311) target = $region64
        $region63: #{tpu_custom_call.1} parent=47 // pred_region
          %314 = dma.done [#allocation9], 2048
        $region64: #{tpu_custom_call.1} parent=47 // pred_fallthru
          _
        %s315 = sand.u32 %s34, 1
        %s316 = scalar_lea.sflag [#allocation3], %s315
        %s317 = sand.u32 %s34, 1
        %s318 = smul.addr %s317, 128
        %s319 = scalar_lea.vmem [#allocation2], %s318
        %p320 = pneg %p47
        %p321 = pneg %p44
        %p322 = pneg %p68
        %p323 = pneg %p65
        %p324 = pneg %p89
        %p325 = pneg %p86
        %p326 = pneg %p110
        %p327 = pneg %p107
        %p328 = pneg %p131
        %p329 = pneg %p128
        %p330 = pneg %p152
        %p331 = pneg %p149
        %p332 = pneg %p173
        %p333 = pneg %p170
        %p334 = pneg %p199
        %p335 = pneg %p196
        %s336 = sand.u32 %s186, 1
        %s337 = scalar_lea.sflag [#allocation4], %s336
        %s338 = sand.u32 %s186, 1
        %s339 = smul.addr %s338, 128
        %s340 = scalar_lea.vmem [#allocation10], %s339
        %s341 = smul.u32 16, %s26
        %s342 = smul.u32 16, %s26
        %v343 = vld [vmem:[%s298] sm:$0xff]
        %v344 = vld [vmem:[%s298 + $0x8] sm:$0xff]
        %v345 = vld [vmem:[%s298 + $0x10] sm:$0xff]
        %v346 = vld [vmem:[%s298 + $0x18] sm:$0xff]
        %v347 = vld [vmem:[%s298 + $0x20] sm:$0xff]
        %v348 = vld [vmem:[%s298 + $0x28] sm:$0xff]
        %v349 = vld [vmem:[%s298 + $0x30] sm:$0xff]
        %v350 = vld [vmem:[%s298 + $0x38] sm:$0xff]
        %v351 = vld [vmem:[%s298 + $0x40] sm:$0xff]
        %v352 = vld [vmem:[%s298 + $0x48] sm:$0xff]
        %v353 = vld [vmem:[%s298 + $0x50] sm:$0xff]
        %v354 = vld [vmem:[%s298 + $0x58] sm:$0xff]
        %v355 = vld [vmem:[%s298 + $0x60] sm:$0xff]
        %v356 = vld [vmem:[%s298 + $0x68] sm:$0xff]
        %v357 = vld [vmem:[%s298 + $0x70] sm:$0xff]
        %v358 = vld [vmem:[%s298 + $0x78] sm:$0xff]
        %v359 = vld [vmem:[#allocation5] sm:$0xff]
        %v360 = vld [vmem:[#allocation5 + $0x8] sm:$0xff]
        %v361 = vld [vmem:[#allocation5 + $0x10] sm:$0xff]
        %v362 = vld [vmem:[#allocation5 + $0x18] sm:$0xff]
        %v363 = vld [vmem:[#allocation5 + $0x20] sm:$0xff]
        %v364 = vld [vmem:[#allocation5 + $0x28] sm:$0xff]
        %v365 = vld [vmem:[#allocation5 + $0x30] sm:$0xff]
        %v366 = vld [vmem:[#allocation5 + $0x38] sm:$0xff]
        %v367 = vld [vmem:[#allocation5 + $0x40] sm:$0xff]
        %v368 = vld [vmem:[#allocation5 + $0x48] sm:$0xff]
        %v369 = vld [vmem:[#allocation5 + $0x50] sm:$0xff]
        %v370 = vld [vmem:[#allocation5 + $0x58] sm:$0xff]
        %v371 = vld [vmem:[#allocation5 + $0x60] sm:$0xff]
        %v372 = vld [vmem:[#allocation5 + $0x68] sm:$0xff]
        %v373 = vld [vmem:[#allocation5 + $0x70] sm:$0xff]
        %v374 = vld [vmem:[#allocation5 + $0x78] sm:$0xff]
        %v375 = vld [vmem:[%s2] sm:$0x1]
        %v377 = vlaneseq
        %v378 = vshrl.u32 %v377, 7
        %v379 = vsub.s32 0, %v378
        %v380 = vrot.slane %v375, %v379
        %382 = vmatprep.subr.mxu0 0.0
        %383 = vmatpush1.msra.mxu0 %v359
        %384 = vmatprep.subr.mxu0 0.0
        %385 = vmatpush1.msra.mxu0 %v360
        %386 = vmatprep.subr.mxu0 0.0
        %387 = vmatpush1.msra.mxu0 %v361
        %388 = vmatprep.subr.mxu0 0.0
        %389 = vmatpush1.msra.mxu0 %v362
        %390 = vmatprep.subr.mxu0 0.0
        %391 = vmatpush1.msra.mxu0 %v363
        %392 = vmatprep.subr.mxu0 0.0
        %393 = vmatpush1.msra.mxu0 %v364
        %394 = vmatprep.subr.mxu0 0.0
        %395 = vmatpush1.msra.mxu0 %v365
        %396 = vmatprep.subr.mxu0 0.0
        %397 = vmatpush1.msra.mxu0 %v366
        %398 = vmatprep.subr.mxu0 0.0
        %399 = vmatpush1.msra.mxu0 %v367
        %400 = vmatprep.subr.mxu0 0.0
        %401 = vmatpush1.msra.mxu0 %v368
        %402 = vmatprep.subr.mxu0 0.0
        %403 = vmatpush1.msra.mxu0 %v369
        %404 = vmatprep.subr.mxu0 0.0
        %405 = vmatpush1.msra.mxu0 %v370
        %406 = vmatprep.subr.mxu0 0.0
        %407 = vmatpush1.msra.mxu0 %v371
        %408 = vmatprep.subr.mxu0 0.0
        %409 = vmatpush1.msra.mxu0 %v372
        %410 = vmatprep.subr.mxu0 0.0
        %411 = vmatpush1.msra.mxu0 %v373
        %412 = vmatprep.subr.mxu0 0.0
        %413 = vmatpush1.msra.mxu0 %v374
        %414 = vmatprep.subr.mxu0 0.0
        %415 = vmatpush1.msra.mxu0 0.0
        %416 = vmatprep.subr.mxu0 0.0
        %417 = vmatpush1.msra.mxu0 0.0
        %418 = vmatprep.subr.mxu0 0.0
        %419 = vmatpush1.msra.mxu0 0.0
        %420 = vmatprep.subr.mxu0 0.0
        %421 = vmatpush1.msra.mxu0 0.0
        %422 = vmatprep.subr.mxu0 0.0
        %423 = vmatpush1.msra.mxu0 0.0
        %424 = vmatprep.subr.mxu0 0.0
        %425 = vmatpush1.msra.mxu0 0.0
        %426 = vmatprep.subr.mxu0 0.0
        %427 = vmatpush1.msra.mxu0 0.0
        %428 = vmatprep.subr.mxu0 0.0
        %429 = vmatpush1.msra.mxu0 0.0
        %430 = vmatprep.subr.mxu0 0.0
        %431 = vmatpush1.msra.mxu0 0.0
        %432 = vmatprep.subr.mxu0 0.0
        %433 = vmatpush1.msra.mxu0 0.0
        %434 = vmatprep.subr.mxu0 0.0
        %435 = vmatpush1.msra.mxu0 0.0
        %436 = vmatprep.subr.mxu0 0.0
        %437 = vmatpush1.msra.mxu0 0.0
        %438 = vmatprep.subr.mxu0 0.0
        %439 = vmatpush1.msra.mxu0 0.0
        %440 = vmatprep.subr.mxu0 0.0
        %441 = vmatpush1.msra.mxu0 0.0
        %442 = vmatprep.subr.mxu0 0.0
        %443 = vmatpush1.msra.mxu0 0.0
        %444 = vmatprep.subr.mxu0 0.0
        %445 = vmatpush1.msra.mxu0 0.0
        %446 = vmatprep.mubr.f32.mxu0 0.0
        %447 = vmatmul.mubr.f32.gmra.mrb[0].mxu0 %v343
        %v448 = vpop.f32.mrb[0].mxu0
        %v449 = vadd.f32 %v380, %v448
        %v450 = vpop.f32.mrb[0].mxu0
        %451 = vmatprep.mubr.f32.mxu0 0.0
        %452 = vmatmul.mubr.f32.gmra.mrb[0].mxu0 %v344
        %v453 = vpop.f32.mrb[0].mxu0
        %v454 = vadd.f32 %v380, %v453
        %v455 = vpop.f32.mrb[0].mxu0
        %456 = vmatprep.mubr.f32.mxu0 0.0
        %457 = vmatmul.mubr.f32.gmra.mrb[0].mxu0 %v345
        %v458 = vpop.f32.mrb[0].mxu0
        %v459 = vadd.f32 %v380, %v458
        %v460 = vpop.f32.mrb[0].mxu0
        %461 = vmatprep.mubr.f32.mxu0 0.0
        %462 = vmatmul.mubr.f32.gmra.mrb[0].mxu0 %v346
        %v463 = vpop.f32.mrb[0].mxu0
        %v464 = vadd.f32 %v380, %v463
        %v465 = vpop.f32.mrb[0].mxu0
        %466 = vmatprep.mubr.f32.mxu0 0.0
        %467 = vmatmul.mubr.f32.gmra.mrb[0].mxu0 %v347
        %v468 = vpop.f32.mrb[0].mxu0
        %v469 = vadd.f32 %v380, %v468
        %v470 = vpop.f32.mrb[0].mxu0
        %471 = vmatprep.mubr.f32.mxu0 0.0
        %472 = vmatmul.mubr.f32.gmra.mrb[0].mxu0 %v348
        %v473 = vpop.f32.mrb[0].mxu0
        %v474 = vadd.f32 %v380, %v473
        %v475 = vpop.f32.mrb[0].mxu0
        %476 = vmatprep.mubr.f32.mxu0 0.0
        %477 = vmatmul.mubr.f32.gmra.mrb[0].mxu0 %v349
        %v478 = vpop.f32.mrb[0].mxu0
        %v479 = vadd.f32 %v380, %v478
        %v480 = vpop.f32.mrb[0].mxu0
        %481 = vmatprep.mubr.f32.mxu0 0.0
        %482 = vmatmul.mubr.f32.gmra.mrb[0].mxu0 %v350
        %v483 = vpop.f32.mrb[0].mxu0
        %v484 = vadd.f32 %v380, %v483
        %v485 = vpop.f32.mrb[0].mxu0
        %486 = vmatprep.mubr.f32.mxu0 0.0
        %487 = vmatmul.mubr.f32.gmra.mrb[0].mxu0 %v351
        %v488 = vpop.f32.mrb[0].mxu0
        %v489 = vadd.f32 %v380, %v488
        %v490 = vpop.f32.mrb[0].mxu0
        %491 = vmatprep.mubr.f32.mxu0 0.0
        %492 = vmatmul.mubr.f32.gmra.mrb[0].mxu0 %v352
        %v493 = vpop.f32.mrb[0].mxu0
        %v494 = vadd.f32 %v380, %v493
        %v495 = vpop.f32.mrb[0].mxu0
        %496 = vmatprep.mubr.f32.mxu0 0.0
        %497 = vmatmul.mubr.f32.gmra.mrb[0].mxu0 %v353
        %v498 = vpop.f32.mrb[0].mxu0
        %v499 = vadd.f32 %v380, %v498
        %v500 = vpop.f32.mrb[0].mxu0
        %501 = vmatprep.mubr.f32.mxu0 0.0
        %502 = vmatmul.mubr.f32.gmra.mrb[0].mxu0 %v354
        %v503 = vpop.f32.mrb[0].mxu0
        %v504 = vadd.f32 %v380, %v503
        %v505 = vpop.f32.mrb[0].mxu0
        %506 = vmatprep.mubr.f32.mxu0 0.0
        %507 = vmatmul.mubr.f32.gmra.mrb[0].mxu0 %v355
        %v508 = vpop.f32.mrb[0].mxu0
        %v509 = vadd.f32 %v380, %v508
        %v510 = vpop.f32.mrb[0].mxu0
        %511 = vmatprep.mubr.f32.mxu0 0.0
        %512 = vmatmul.mubr.f32.gmra.mrb[0].mxu0 %v356
        %v513 = vpop.f32.mrb[0].mxu0
        %v514 = vadd.f32 %v380, %v513
        %v515 = vpop.f32.mrb[0].mxu0
        %516 = vmatprep.mubr.f32.mxu0 0.0
        %517 = vmatmul.mubr.f32.gmra.mrb[0].mxu0 %v357
        %v518 = vpop.f32.mrb[0].mxu0
        %v519 = vadd.f32 %v380, %v518
        %v520 = vpop.f32.mrb[0].mxu0
        %521 = vmatprep.mubr.f32.mxu0 0.0
        %522 = vmatmul.mubr.f32.gmra.mrb[0].mxu0 %v358
        %v523 = vpop.f32.mrb[0].mxu0
        %v524 = vadd.f32 %v380, %v523
        %v525 = vpop.f32.mrb[0].mxu0
        %526 = vdwg.mxu0
        %v527 = vmax.f32 %v449, 0.0
        %v528 = vmax.f32 %v454, 0.0
        %v529 = vmax.f32 %v459, 0.0
        %v530 = vmax.f32 %v464, 0.0
        %v531 = vmax.f32 %v469, 0.0
        %v532 = vmax.f32 %v474, 0.0
        %v533 = vmax.f32 %v479, 0.0
        %v534 = vmax.f32 %v484, 0.0
        %v535 = vmax.f32 %v489, 0.0
        %v536 = vmax.f32 %v494, 0.0
        %v537 = vmax.f32 %v499, 0.0
        %v538 = vmax.f32 %v504, 0.0
        %v539 = vmax.f32 %v509, 0.0
        %v540 = vmax.f32 %v514, 0.0
        %v541 = vmax.f32 %v519, 0.0
        %v542 = vmax.f32 %v524, 0.0
        %v543 = vld [vmem:[#allocation7] sm:$0xff]
        %v544 = vld [vmem:[#allocation7 + $0x8] sm:$0xff]
        %v545 = vld [vmem:[#allocation7 + $0x10] sm:$0xff]
        %v546 = vld [vmem:[#allocation7 + $0x18] sm:$0xff]
        %v547 = vld [vmem:[#allocation7 + $0x20] sm:$0xff]
        %v548 = vld [vmem:[#allocation7 + $0x28] sm:$0xff]
        %v549 = vld [vmem:[#allocation7 + $0x30] sm:$0xff]
        %v550 = vld [vmem:[#allocation7 + $0x38] sm:$0xff]
        %v551 = vld [vmem:[#allocation7 + $0x40] sm:$0xff]
        %v552 = vld [vmem:[#allocation7 + $0x48] sm:$0xff]
        %v553 = vld [vmem:[#allocation7 + $0x50] sm:$0xff]
        %v554 = vld [vmem:[#allocation7 + $0x58] sm:$0xff]
        %v555 = vld [vmem:[#allocation7 + $0x60] sm:$0xff]
        %v556 = vld [vmem:[#allocation7 + $0x68] sm:$0xff]
        %v557 = vld [vmem:[#allocation7 + $0x70] sm:$0xff]
        %v558 = vld [vmem:[#allocation7 + $0x78] sm:$0xff]
        %v559 = vld [vmem:[%s4] sm:$0x1]
        %v561 = vlaneseq
        %v562 = vshrl.u32 %v561, 7
        %v563 = vsub.s32 0, %v562
        %v564 = vrot.slane %v559, %v563
        %566 = vmatprep.subr.mxu0 0.0
        %567 = vmatpush1.msra.mxu0 %v543
        %568 = vmatprep.subr.mxu0 0.0
        %569 = vmatpush1.msra.mxu0 %v544
        %570 = vmatprep.subr.mxu0 0.0
        %571 = vmatpush1.msra.mxu0 %v545
        %572 = vmatprep.subr.mxu0 0.0
        %573 = vmatpush1.msra.mxu0 %v546
        %574 = vmatprep.subr.mxu0 0.0
        %575 = vmatpush1.msra.mxu0 %v547
        %576 = vmatprep.subr.mxu0 0.0
        %577 = vmatpush1.msra.mxu0 %v548
        %578 = vmatprep.subr.mxu0 0.0
        %579 = vmatpush1.msra.mxu0 %v549
        %580 = vmatprep.subr.mxu0 0.0
        %581 = vmatpush1.msra.mxu0 %v550
        %582 = vmatprep.subr.mxu0 0.0
        %583 = vmatpush1.msra.mxu0 %v551
        %584 = vmatprep.subr.mxu0 0.0
        %585 = vmatpush1.msra.mxu0 %v552
        %586 = vmatprep.subr.mxu0 0.0
        %587 = vmatpush1.msra.mxu0 %v553
        %588 = vmatprep.subr.mxu0 0.0
        %589 = vmatpush1.msra.mxu0 %v554
        %590 = vmatprep.subr.mxu0 0.0
        %591 = vmatpush1.msra.mxu0 %v555
        %592 = vmatprep.subr.mxu0 0.0
        %593 = vmatpush1.msra.mxu0 %v556
        %594 = vmatprep.subr.mxu0 0.0
        %595 = vmatpush1.msra.mxu0 %v557
        %596 = vmatprep.subr.mxu0 0.0
        %597 = vmatpush1.msra.mxu0 %v558
        %598 = vmatprep.subr.mxu0 0.0
        %599 = vmatpush1.msra.mxu0 0.0
        %600 = vmatprep.subr.mxu0 0.0
        %601 = vmatpush1.msra.mxu0 0.0
        %602 = vmatprep.subr.mxu0 0.0
        %603 = vmatpush1.msra.mxu0 0.0
        %604 = vmatprep.subr.mxu0 0.0
        %605 = vmatpush1.msra.mxu0 0.0
        %606 = vmatprep.subr.mxu0 0.0
        %607 = vmatpush1.msra.mxu0 0.0
        %608 = vmatprep.subr.mxu0 0.0
        %609 = vmatpush1.msra.mxu0 0.0
        %610 = vmatprep.subr.mxu0 0.0
        %611 = vmatpush1.msra.mxu0 0.0
        %612 = vmatprep.subr.mxu0 0.0
        %613 = vmatpush1.msra.mxu0 0.0
        %614 = vmatprep.subr.mxu0 0.0
        %615 = vmatpush1.msra.mxu0 0.0
        %616 = vmatprep.subr.mxu0 0.0
        %617 = vmatpush1.msra.mxu0 0.0
        %618 = vmatprep.subr.mxu0 0.0
        %619 = vmatpush1.msra.mxu0 0.0
        %620 = vmatprep.subr.mxu0 0.0
        %621 = vmatpush1.msra.mxu0 0.0
        %622 = vmatprep.subr.mxu0 0.0
        %623 = vmatpush1.msra.mxu0 0.0
        %624 = vmatprep.subr.mxu0 0.0
        %625 = vmatpush1.msra.mxu0 0.0
        %626 = vmatprep.subr.mxu0 0.0
        %627 = vmatpush1.msra.mxu0 0.0
        %628 = vmatprep.subr.mxu0 0.0
        %629 = vmatpush1.msra.mxu0 0.0
        %630 = vmatprep.mubr.f32.mxu0 0.0
        %631 = vmatmul.mubr.f32.gmra.mrb[0].mxu0 %v527
        %v632 = vpop.f32.mrb[0].mxu0
        %v633 = vadd.f32 %v564, %v632
        %v634 = vpop.f32.mrb[0].mxu0
        %635 = vmatprep.mubr.f32.mxu0 0.0
        %636 = vmatmul.mubr.f32.gmra.mrb[0].mxu0 %v528
        %v637 = vpop.f32.mrb[0].mxu0
        %v638 = vadd.f32 %v564, %v637
        %v639 = vpop.f32.mrb[0].mxu0
        %640 = vmatprep.mubr.f32.mxu0 0.0
        %641 = vmatmul.mubr.f32.gmra.mrb[0].mxu0 %v529
        %v642 = vpop.f32.mrb[0].mxu0
        %v643 = vadd.f32 %v564, %v642
        %v644 = vpop.f32.mrb[0].mxu0
        %645 = vmatprep.mubr.f32.mxu0 0.0
        %646 = vmatmul.mubr.f32.gmra.mrb[0].mxu0 %v530
        %v647 = vpop.f32.mrb[0].mxu0
        %v648 = vadd.f32 %v564, %v647
        %v649 = vpop.f32.mrb[0].mxu0
        %650 = vmatprep.mubr.f32.mxu0 0.0
        %651 = vmatmul.mubr.f32.gmra.mrb[0].mxu0 %v531
        %v652 = vpop.f32.mrb[0].mxu0
        %v653 = vadd.f32 %v564, %v652
        %v654 = vpop.f32.mrb[0].mxu0
        %655 = vmatprep.mubr.f32.mxu0 0.0
        %656 = vmatmul.mubr.f32.gmra.mrb[0].mxu0 %v532
        %v657 = vpop.f32.mrb[0].mxu0
        %v658 = vadd.f32 %v564, %v657
        %v659 = vpop.f32.mrb[0].mxu0
        %660 = vmatprep.mubr.f32.mxu0 0.0
        %661 = vmatmul.mubr.f32.gmra.mrb[0].mxu0 %v533
        %v662 = vpop.f32.mrb[0].mxu0
        %v663 = vadd.f32 %v564, %v662
        %v664 = vpop.f32.mrb[0].mxu0
        %665 = vmatprep.mubr.f32.mxu0 0.0
        %666 = vmatmul.mubr.f32.gmra.mrb[0].mxu0 %v534
        %v667 = vpop.f32.mrb[0].mxu0
        %v668 = vadd.f32 %v564, %v667
        %v669 = vpop.f32.mrb[0].mxu0
        %670 = vmatprep.mubr.f32.mxu0 0.0
        %671 = vmatmul.mubr.f32.gmra.mrb[0].mxu0 %v535
        %v672 = vpop.f32.mrb[0].mxu0
        %v673 = vadd.f32 %v564, %v672
        %v674 = vpop.f32.mrb[0].mxu0
        %675 = vmatprep.mubr.f32.mxu0 0.0
        %676 = vmatmul.mubr.f32.gmra.mrb[0].mxu0 %v536
        %v677 = vpop.f32.mrb[0].mxu0
        %v678 = vadd.f32 %v564, %v677
        %v679 = vpop.f32.mrb[0].mxu0
        %680 = vmatprep.mubr.f32.mxu0 0.0
        %681 = vmatmul.mubr.f32.gmra.mrb[0].mxu0 %v537
        %v682 = vpop.f32.mrb[0].mxu0
        %v683 = vadd.f32 %v564, %v682
        %v684 = vpop.f32.mrb[0].mxu0
        %685 = vmatprep.mubr.f32.mxu0 0.0
        %686 = vmatmul.mubr.f32.gmra.mrb[0].mxu0 %v538
        %v687 = vpop.f32.mrb[0].mxu0
        %v688 = vadd.f32 %v564, %v687
        %v689 = vpop.f32.mrb[0].mxu0
        %690 = vmatprep.mubr.f32.mxu0 0.0
        %691 = vmatmul.mubr.f32.gmra.mrb[0].mxu0 %v539
        %v692 = vpop.f32.mrb[0].mxu0
        %v693 = vadd.f32 %v564, %v692
        %v694 = vpop.f32.mrb[0].mxu0
        %695 = vmatprep.mubr.f32.mxu0 0.0
        %696 = vmatmul.mubr.f32.gmra.mrb[0].mxu0 %v540
        %v697 = vpop.f32.mrb[0].mxu0
        %v698 = vadd.f32 %v564, %v697
        %v699 = vpop.f32.mrb[0].mxu0
        %700 = vmatprep.mubr.f32.mxu0 0.0
        %701 = vmatmul.mubr.f32.gmra.mrb[0].mxu0 %v541
        %v702 = vpop.f32.mrb[0].mxu0
        %v703 = vadd.f32 %v564, %v702
        %v704 = vpop.f32.mrb[0].mxu0
        %705 = vmatprep.mubr.f32.mxu0 0.0
        %706 = vmatmul.mubr.f32.gmra.mrb[0].mxu0 %v542
        %v707 = vpop.f32.mrb[0].mxu0
        %v708 = vadd.f32 %v564, %v707
        %v709 = vpop.f32.mrb[0].mxu0
        %710 = vdwg.mxu0
        %v711 = vmax.f32 %v633, 0.0
        %v712 = vmax.f32 %v638, 0.0
        %v713 = vmax.f32 %v643, 0.0
        %v714 = vmax.f32 %v648, 0.0
        %v715 = vmax.f32 %v653, 0.0
        %v716 = vmax.f32 %v658, 0.0
        %v717 = vmax.f32 %v663, 0.0
        %v718 = vmax.f32 %v668, 0.0
        %v719 = vmax.f32 %v673, 0.0
        %v720 = vmax.f32 %v678, 0.0
        %v721 = vmax.f32 %v683, 0.0
        %v722 = vmax.f32 %v688, 0.0
        %v723 = vmax.f32 %v693, 0.0
        %v724 = vmax.f32 %v698, 0.0
        %v725 = vmax.f32 %v703, 0.0
        %v726 = vmax.f32 %v708, 0.0
        %v727 = vld [vmem:[#allocation8] sm:$0xff]
        %v728 = vld [vmem:[#allocation8 + $0x8] sm:$0xff]
        %v729 = vld [vmem:[#allocation8 + $0x10] sm:$0xff]
        %v730 = vld [vmem:[#allocation8 + $0x18] sm:$0xff]
        %v731 = vld [vmem:[#allocation8 + $0x20] sm:$0xff]
        %v732 = vld [vmem:[#allocation8 + $0x28] sm:$0xff]
        %v733 = vld [vmem:[#allocation8 + $0x30] sm:$0xff]
        %v734 = vld [vmem:[#allocation8 + $0x38] sm:$0xff]
        %v735 = vld [vmem:[#allocation8 + $0x40] sm:$0xff]
        %v736 = vld [vmem:[#allocation8 + $0x48] sm:$0xff]
        %v737 = vld [vmem:[#allocation8 + $0x50] sm:$0xff]
        %v738 = vld [vmem:[#allocation8 + $0x58] sm:$0xff]
        %v739 = vld [vmem:[#allocation8 + $0x60] sm:$0xff]
        %v740 = vld [vmem:[#allocation8 + $0x68] sm:$0xff]
        %v741 = vld [vmem:[#allocation8 + $0x70] sm:$0xff]
        %v742 = vld [vmem:[#allocation8 + $0x78] sm:$0xff]
        %v743 = vld [vmem:[%s6] sm:$0x1]
        %v745 = vlaneseq
        %v746 = vshrl.u32 %v745, 7
        %v747 = vsub.s32 0, %v746
        %v748 = vrot.slane %v743, %v747
        %750 = vmatprep.subr.mxu0 0.0
        %751 = vmatpush1.msra.mxu0 %v727
        %752 = vmatprep.subr.mxu0 0.0
        %753 = vmatpush1.msra.mxu0 %v728
        %754 = vmatprep.subr.mxu0 0.0
        %755 = vmatpush1.msra.mxu0 %v729
        %756 = vmatprep.subr.mxu0 0.0
        %757 = vmatpush1.msra.mxu0 %v730
        %758 = vmatprep.subr.mxu0 0.0
        %759 = vmatpush1.msra.mxu0 %v731
        %760 = vmatprep.subr.mxu0 0.0
        %761 = vmatpush1.msra.mxu0 %v732
        %762 = vmatprep.subr.mxu0 0.0
        %763 = vmatpush1.msra.mxu0 %v733
        %764 = vmatprep.subr.mxu0 0.0
        %765 = vmatpush1.msra.mxu0 %v734
        %766 = vmatprep.subr.mxu0 0.0
        %767 = vmatpush1.msra.mxu0 %v735
        %768 = vmatprep.subr.mxu0 0.0
        %769 = vmatpush1.msra.mxu0 %v736
        %770 = vmatprep.subr.mxu0 0.0
        %771 = vmatpush1.msra.mxu0 %v737
        %772 = vmatprep.subr.mxu0 0.0
        %773 = vmatpush1.msra.mxu0 %v738
        %774 = vmatprep.subr.mxu0 0.0
        %775 = vmatpush1.msra.mxu0 %v739
        %776 = vmatprep.subr.mxu0 0.0
        %777 = vmatpush1.msra.mxu0 %v740
        %778 = vmatprep.subr.mxu0 0.0
        %779 = vmatpush1.msra.mxu0 %v741
        %780 = vmatprep.subr.mxu0 0.0
        %781 = vmatpush1.msra.mxu0 %v742
        %782 = vmatprep.subr.mxu0 0.0
        %783 = vmatpush1.msra.mxu0 0.0
        %784 = vmatprep.subr.mxu0 0.0
        %785 = vmatpush1.msra.mxu0 0.0
        %786 = vmatprep.subr.mxu0 0.0
        %787 = vmatpush1.msra.mxu0 0.0
        %788 = vmatprep.subr.mxu0 0.0
        %789 = vmatpush1.msra.mxu0 0.0
        %790 = vmatprep.subr.mxu0 0.0
        %791 = vmatpush1.msra.mxu0 0.0
        %792 = vmatprep.subr.mxu0 0.0
        %793 = vmatpush1.msra.mxu0 0.0
        %794 = vmatprep.subr.mxu0 0.0
        %795 = vmatpush1.msra.mxu0 0.0
        %796 = vmatprep.subr.mxu0 0.0
        %797 = vmatpush1.msra.mxu0 0.0
        %798 = vmatprep.subr.mxu0 0.0
        %799 = vmatpush1.msra.mxu0 0.0
        %800 = vmatprep.subr.mxu0 0.0
        %801 = vmatpush1.msra.mxu0 0.0
        %802 = vmatprep.subr.mxu0 0.0
        %803 = vmatpush1.msra.mxu0 0.0
        %804 = vmatprep.subr.mxu0 0.0
        %805 = vmatpush1.msra.mxu0 0.0
        %806 = vmatprep.subr.mxu0 0.0
        %807 = vmatpush1.msra.mxu0 0.0
        %808 = vmatprep.subr.mxu0 0.0
        %809 = vmatpush1.msra.mxu0 0.0
        %810 = vmatprep.subr.mxu0 0.0
        %811 = vmatpush1.msra.mxu0 0.0
        %812 = vmatprep.subr.mxu0 0.0
        %813 = vmatpush1.msra.mxu0 0.0
        %814 = vmatprep.mubr.f32.mxu0 0.0
        %815 = vmatmul.mubr.f32.gmra.mrb[0].mxu0 %v711
        %v816 = vpop.f32.mrb[0].mxu0
        %v817 = vadd.f32 %v748, %v816
        %v818 = vpop.f32.mrb[0].mxu0
        %819 = vmatprep.mubr.f32.mxu0 0.0
        %820 = vmatmul.mubr.f32.gmra.mrb[0].mxu0 %v712
        %v821 = vpop.f32.mrb[0].mxu0
        %v822 = vadd.f32 %v748, %v821
        %v823 = vpop.f32.mrb[0].mxu0
        %824 = vmatprep.mubr.f32.mxu0 0.0
        %825 = vmatmul.mubr.f32.gmra.mrb[0].mxu0 %v713
        %v826 = vpop.f32.mrb[0].mxu0
        %v827 = vadd.f32 %v748, %v826
        %v828 = vpop.f32.mrb[0].mxu0
        %829 = vmatprep.mubr.f32.mxu0 0.0
        %830 = vmatmul.mubr.f32.gmra.mrb[0].mxu0 %v714
        %v831 = vpop.f32.mrb[0].mxu0
        %v832 = vadd.f32 %v748, %v831
        %v833 = vpop.f32.mrb[0].mxu0
        %834 = vmatprep.mubr.f32.mxu0 0.0
        %835 = vmatmul.mubr.f32.gmra.mrb[0].mxu0 %v715
        %v836 = vpop.f32.mrb[0].mxu0
        %v837 = vadd.f32 %v748, %v836
        %v838 = vpop.f32.mrb[0].mxu0
        %839 = vmatprep.mubr.f32.mxu0 0.0
        %840 = vmatmul.mubr.f32.gmra.mrb[0].mxu0 %v716
        %v841 = vpop.f32.mrb[0].mxu0
        %v842 = vadd.f32 %v748, %v841
        %v843 = vpop.f32.mrb[0].mxu0
        %844 = vmatprep.mubr.f32.mxu0 0.0
        %845 = vmatmul.mubr.f32.gmra.mrb[0].mxu0 %v717
        %v846 = vpop.f32.mrb[0].mxu0
        %v847 = vadd.f32 %v748, %v846
        %v848 = vpop.f32.mrb[0].mxu0
        %849 = vmatprep.mubr.f32.mxu0 0.0
        %850 = vmatmul.mubr.f32.gmra.mrb[0].mxu0 %v718
        %v851 = vpop.f32.mrb[0].mxu0
        %v852 = vadd.f32 %v748, %v851
        %v853 = vpop.f32.mrb[0].mxu0
        %854 = vmatprep.mubr.f32.mxu0 0.0
        %855 = vmatmul.mubr.f32.gmra.mrb[0].mxu0 %v719
        %v856 = vpop.f32.mrb[0].mxu0
        %v857 = vadd.f32 %v748, %v856
        %v858 = vpop.f32.mrb[0].mxu0
        %859 = vmatprep.mubr.f32.mxu0 0.0
        %860 = vmatmul.mubr.f32.gmra.mrb[0].mxu0 %v720
        %v861 = vpop.f32.mrb[0].mxu0
        %v862 = vadd.f32 %v748, %v861
        %v863 = vpop.f32.mrb[0].mxu0
        %864 = vmatprep.mubr.f32.mxu0 0.0
        %865 = vmatmul.mubr.f32.gmra.mrb[0].mxu0 %v721
        %v866 = vpop.f32.mrb[0].mxu0
        %v867 = vadd.f32 %v748, %v866
        %v868 = vpop.f32.mrb[0].mxu0
        %869 = vmatprep.mubr.f32.mxu0 0.0
        %870 = vmatmul.mubr.f32.gmra.mrb[0].mxu0 %v722
        %v871 = vpop.f32.mrb[0].mxu0
        %v872 = vadd.f32 %v748, %v871
        %v873 = vpop.f32.mrb[0].mxu0
        %874 = vmatprep.mubr.f32.mxu0 0.0
        %875 = vmatmul.mubr.f32.gmra.mrb[0].mxu0 %v723
        %v876 = vpop.f32.mrb[0].mxu0
        %v877 = vadd.f32 %v748, %v876
        %v878 = vpop.f32.mrb[0].mxu0
        %879 = vmatprep.mubr.f32.mxu0 0.0
        %880 = vmatmul.mubr.f32.gmra.mrb[0].mxu0 %v724
        %v881 = vpop.f32.mrb[0].mxu0
        %v882 = vadd.f32 %v748, %v881
        %v883 = vpop.f32.mrb[0].mxu0
        %884 = vmatprep.mubr.f32.mxu0 0.0
        %885 = vmatmul.mubr.f32.gmra.mrb[0].mxu0 %v725
        %v886 = vpop.f32.mrb[0].mxu0
        %v887 = vadd.f32 %v748, %v886
        %v888 = vpop.f32.mrb[0].mxu0
        %889 = vmatprep.mubr.f32.mxu0 0.0
        %890 = vmatmul.mubr.f32.gmra.mrb[0].mxu0 %v726
        %v891 = vpop.f32.mrb[0].mxu0
        %v892 = vadd.f32 %v748, %v891
        %v893 = vpop.f32.mrb[0].mxu0
        %894 = vdwg.mxu0
        %v895 = vxor.u32 %v817, 2147483648
        %v896 = vxor.u32 %v822, 2147483648
        %v897 = vxor.u32 %v827, 2147483648
        %v898 = vxor.u32 %v832, 2147483648
        %v899 = vxor.u32 %v837, 2147483648
        %v900 = vxor.u32 %v842, 2147483648
        %v901 = vxor.u32 %v847, 2147483648
        %v902 = vxor.u32 %v852, 2147483648
        %v903 = vxor.u32 %v857, 2147483648
        %v904 = vxor.u32 %v862, 2147483648
        %v905 = vxor.u32 %v867, 2147483648
        %v906 = vxor.u32 %v872, 2147483648
        %v907 = vxor.u32 %v877, 2147483648
        %v908 = vxor.u32 %v882, 2147483648
        %v909 = vxor.u32 %v887, 2147483648
        %v910 = vxor.u32 %v892, 2147483648
        %v911 = vmul.f32 %v895, 1.442695
        %v912 = vpow.pop %v911
        %v913 = vmul.f32 %v896, 1.442695
        %v914 = vpow.pop %v913
        %v915 = vmul.f32 %v897, 1.442695
        %v916 = vpow.pop %v915
        %v917 = vmul.f32 %v898, 1.442695
        %v918 = vpow.pop %v917
        %v919 = vmul.f32 %v899, 1.442695
        %v920 = vpow.pop %v919
        %v921 = vmul.f32 %v900, 1.442695
        %v922 = vpow.pop %v921
        %v923 = vmul.f32 %v901, 1.442695
        %v924 = vpow.pop %v923
        %v925 = vmul.f32 %v902, 1.442695
        %v926 = vpow.pop %v925
        %v927 = vmul.f32 %v903, 1.442695
        %v928 = vpow.pop %v927
        %v929 = vmul.f32 %v904, 1.442695
        %v930 = vpow.pop %v929
        %v931 = vmul.f32 %v905, 1.442695
        %v932 = vpow.pop %v931
        %v933 = vmul.f32 %v906, 1.442695
        %v934 = vpow.pop %v933
        %v935 = vmul.f32 %v907, 1.442695
        %v936 = vpow.pop %v935
        %v937 = vmul.f32 %v908, 1.442695
        %v938 = vpow.pop %v937
        %v939 = vmul.f32 %v909, 1.442695
        %v940 = vpow.pop %v939
        %v941 = vmul.f32 %v910, 1.442695
        %v942 = vpow.pop %v941
        %v943 = vadd.f32 %v912, 1.0
        %v944 = vadd.f32 %v914, 1.0
        %v945 = vadd.f32 %v916, 1.0
        %v946 = vadd.f32 %v918, 1.0
        %v947 = vadd.f32 %v920, 1.0
        %v948 = vadd.f32 %v922, 1.0
        %v949 = vadd.f32 %v924, 1.0
        %v950 = vadd.f32 %v926, 1.0
        %v951 = vadd.f32 %v928, 1.0
        %v952 = vadd.f32 %v930, 1.0
        %v953 = vadd.f32 %v932, 1.0
        %v954 = vadd.f32 %v934, 1.0
        %v955 = vadd.f32 %v936, 1.0
        %v956 = vadd.f32 %v938, 1.0
        %v957 = vadd.f32 %v940, 1.0
        %v958 = vadd.f32 %v942, 1.0
        %v959 = vrcp.pop %v943
        %v960 = vmul.f32 1.0, %v959
        %v961 = vrcp.pop %v944
        %v962 = vmul.f32 1.0, %v961
        %v963 = vrcp.pop %v945
        %v964 = vmul.f32 1.0, %v963
        %v965 = vrcp.pop %v946
        %v966 = vmul.f32 1.0, %v965
        %v967 = vrcp.pop %v947
        %v968 = vmul.f32 1.0, %v967
        %v969 = vrcp.pop %v948
        %v970 = vmul.f32 1.0, %v969
        %v971 = vrcp.pop %v949
        %v972 = vmul.f32 1.0, %v971
        %v973 = vrcp.pop %v950
        %v974 = vmul.f32 1.0, %v973
        %v975 = vrcp.pop %v951
        %v976 = vmul.f32 1.0, %v975
        %v977 = vrcp.pop %v952
        %v978 = vmul.f32 1.0, %v977
        %v979 = vrcp.pop %v953
        %v980 = vmul.f32 1.0, %v979
        %v981 = vrcp.pop %v954
        %v982 = vmul.f32 1.0, %v981
        %v983 = vrcp.pop %v955
        %v984 = vmul.f32 1.0, %v983
        %v985 = vrcp.pop %v956
        %v986 = vmul.f32 1.0, %v985
        %v987 = vrcp.pop %v957
        %v988 = vmul.f32 1.0, %v987
        %v989 = vrcp.pop %v958
        %v990 = vmul.f32 1.0, %v989
        %991 = vst [vmem:[%s340] sm:$0xff] %v960
        %992 = vst [vmem:[%s340 + $0x8] sm:$0xff] %v962
        %993 = vst [vmem:[%s340 + $0x10] sm:$0xff] %v964
        %994 = vst [vmem:[%s340 + $0x18] sm:$0xff] %v966
        %995 = vst [vmem:[%s340 + $0x20] sm:$0xff] %v968
        %996 = vst [vmem:[%s340 + $0x28] sm:$0xff] %v970
        %997 = vst [vmem:[%s340 + $0x30] sm:$0xff] %v972
        %998 = vst [vmem:[%s340 + $0x38] sm:$0xff] %v974
        %999 = vst [vmem:[%s340 + $0x40] sm:$0xff] %v976
        %1000 = vst [vmem:[%s340 + $0x48] sm:$0xff] %v978
        %1001 = vst [vmem:[%s340 + $0x50] sm:$0xff] %v980
        %1002 = vst [vmem:[%s340 + $0x58] sm:$0xff] %v982
        %1003 = vst [vmem:[%s340 + $0x60] sm:$0xff] %v984
        %1004 = vst [vmem:[%s340 + $0x68] sm:$0xff] %v986
        %1005 = vst [vmem:[%s340 + $0x70] sm:$0xff] %v988
        %1006 = vst [vmem:[%s340 + $0x78] sm:$0xff] %v990
        %s1007 = sand.u32 %s186, 1
        %s1008 = scalar_lea.sflag [#allocation4], %s1007
        %s1009 = sand.u32 %s186, 1
        %s1010 = smul.addr %s1009, 128
        %s1011 = scalar_lea.vmem [#allocation10], %s1010
        // Predicated region
        $region65: #{tpu_custom_call.1} parent=47 // pred_check
          %p1012 = pneg %p196
        $region66: #{tpu_custom_call.1} parent=47 // pred_check_branch
          %1014 = sbr.rel (%p1012) target = $region68
        $region67: #{tpu_custom_call.1} parent=47 // pred_region
          %s1015 = smul.u32 16, %s26
          %s1017 = ssub.s32 2048, 2048
          %1018 = vsyncadd %s1008, %s1017
          %s1019 = smul.addr %s1015, 128
          %s1020 = scalar_lea.hbm %s7, %s1019
          %s1021 = sshll.u32 %s1011, 4
          %s1022 = int_to_ptr.vmem [resolvable:$true] %s1021
          %1027 = dma.vmem_to_hbm [thread:$0]  %s1022, 2048, %s1020, %s1008, 128, 128, 8
        $region68: #{tpu_custom_call.1} parent=47 // pred_fallthru
          _
      $region48: #{tpu_custom_call.1} parent=5 // pred_fallthru
        _
      %p1028 = scmp.le.s32.totalorder 2, %s21
      // Predicated region
      $region69: #{tpu_custom_call.1} parent=5 // pred_check
        %p1029 = pneg %p1028
      $region70: #{tpu_custom_call.1} parent=5 // pred_check_branch
        %1031 = sbr.rel (%p1029) target = $region72
      $region71: #{tpu_custom_call.1} parent=5 // pred_region
        %s1032 = ssub.s32 %s21, 2
        // Predicated region
        $region73: #{tpu_custom_call.1} parent=71 // pred_check
          %p1033 = pneg %p202
        $region74: #{tpu_custom_call.1} parent=71 // pred_check_branch
          %1035 = sbr.rel (%p1033) target = $region76
        $region75: #{tpu_custom_call.1} parent=71 // pred_region
          %s1036 = sand.u32 %s187, 1
          %s1037 = scalar_lea.sflag [#allocation4], %s1036
          %s1038 = sand.u32 %s187, 1
          %s1039 = smul.addr %s1038, 128
          %s1040 = scalar_lea.vmem [#allocation10], %s1039
          %1041 = dma.done %s1037, 2048
        $region76: #{tpu_custom_call.1} parent=71 // pred_fallthru
          _
      $region72: #{tpu_custom_call.1} parent=5 // pred_fallthru
        _
    $region6: #{tpu_custom_call.1} parent=1 // loop_footer
      %s25 = sadd.s32 1, %s21
    $region7: #{tpu_custom_call.1} parent=1 // loop_footer_branch
      %20 = sbr.rel target = $region3
    $region8: #{tpu_custom_call.1} parent=1 // loop_exit
      _
    %1042 = vsyncpa [#allocation3], 1
    %s1043 = scalar_lea.sflag [#allocation3], 1
    %1044 = vsyncpa %s1043, 1
    %1045 = vsyncpa [#allocation6], 1
    %1046 = vsyncpa [#allocation9], 1
    %1047 = vsyncpa [#allocation4], 1
    %s1048 = scalar_lea.sflag [#allocation4], 1
    %1049 = vsyncpa %s1048, 1

</llo_original>
